<compile_context>
chip_gen: v5e
topology: v5e:2x2
jax: 0.10.0
libtpu: 0.0.40
codegen_flags: <defaults>
</compile_context>

<pallas_src>
import math
from functools import partial

import jax
import jax.numpy as jnp
from jax.experimental import pallas as pl
from jax.experimental.pallas import tpu as pltpu


def _ffn_hidden_dim(hidden_dim: int, multiple_of: int) -> int:
    hidden_dim = (2 * hidden_dim) // 3          # exact integer math
    return multiple_of * ((hidden_dim + multiple_of - 1) // multiple_of)


def _round_up(x: int, m: int) -> int:
    return ((x + m - 1) // m) * m


# --------------------------------------------------------------------------
# Kernel
# --------------------------------------------------------------------------
def ffn_kernel(x_ref, w13_ref, w2_ref, o_ref, acc_ref):
    # x_ref:   (tm, dim)        bf16 token tile (resident across hidden axis)
    # w13_ref: (dim, 2*th)      bf16 fused [W1^T chunk | W3^T chunk]
    # w2_ref:  (th, dim)        bf16 W2^T chunk
    # o_ref:   (tm, dim)        output tile (written on last hidden chunk)
    # acc_ref: (tm, dim) f32    accumulator scratch
    k = pl.program_id(1)

    @pl.when(k == 0)
    def _init():
        acc_ref[...] = jnp.zeros_like(acc_ref)

    x = x_ref[...]
    # single fused gate projection: (tm, 2*th) f32
    h = jnp.dot(x, w13_ref[...], preferred_element_type=jnp.float32)
    th = w2_ref.shape[0]
    h1 = h[:, :th]
    h3 = h[:, th:]
    # silu(h1) * h3 in f32; exp + approx reciprocal keep the work on the EUP.
    gated = (h1 * pl.reciprocal(1.0 + jnp.exp(-h1), approx=True)) * h3
    # Deliberate bf16 round of the gated activation before the MXU (llama-style).
    acc_ref[...] += jnp.dot(gated.astype(w2_ref.dtype), w2_ref[...],
                            preferred_element_type=jnp.float32)

    @pl.when(k == pl.num_programs(1) - 1)
    def _finalize():
        o_ref[...] = acc_ref[...].astype(o_ref.dtype)


# --------------------------------------------------------------------------
# One-time weight packing (keep OUT of the per-call path in real use)
# --------------------------------------------------------------------------
def pack_ffn_weights(w1, w2, w3, *, block_hidden=512, compute_dtype=jnp.bfloat16):
    """w1,w3: (hidden, dim); w2: (dim, hidden)  [PyTorch nn.Linear layout].

    Returns (w13, w2_t, th):
      w13:  (dim, 2*hidden_p) bf16, chunk-interleaved [W1^T | W3^T] per hidden
            chunk of width th, so one (dim, 2*th) block feeds one fused dot.
      w2_t: (hidden_p, dim)  bf16  W2^T, hidden padded to a multiple of th.
    """
    hidden, dim = w1.shape
    th = min(block_hidden, _round_up(hidden, 128))
    hidden_p = _round_up(hidden, th)
    n_chunks = hidden_p // th
    pad_h = hidden_p - hidden

    w1_t = jnp.pad(w1.T, ((0, 0), (0, pad_h))).astype(compute_dtype)   # (dim, hidden_p)
    w3_t = jnp.pad(w3.T, ((0, 0), (0, pad_h))).astype(compute_dtype)   # (dim, hidden_p)
    w2_t = jnp.pad(w2.T, ((0, pad_h), (0, 0))).astype(compute_dtype)   # (hidden_p, dim)

    w13 = jnp.concatenate(
        [w1_t.reshape(dim, n_chunks, th), w3_t.reshape(dim, n_chunks, th)],
        axis=2,
    ).reshape(dim, 2 * hidden_p)
    return w13, w2_t, th


# --------------------------------------------------------------------------
# Wrapper
# --------------------------------------------------------------------------
def feed_forward(x, w13, w2_t, th, *, tm=256, compute_dtype=jnp.bfloat16):
    """x: (..., dim); w13: (dim, 2*hidden_p); w2_t: (hidden_p, dim)."""
    orig_shape = x.shape
    dim = orig_shape[-1]
    hidden_p = w2_t.shape[0]
    n_chunks = hidden_p // th

    x2d = x.reshape(-1, dim)
    tokens = x2d.shape[0]

    # Token tile: large, but never bigger than the (sublane-rounded) token count.
    tm_eff = _round_up(min(tm, _round_up(tokens, 8)), 8)
    tokens_p = _round_up(tokens, tm_eff)
    if tokens_p != tokens:
        x2d = jnp.pad(x2d, ((0, tokens_p - tokens), (0, 0)))
    x2d = x2d.astype(compute_dtype)

    out_dtype = x.dtype
    cdt_bytes = jnp.dtype(compute_dtype).itemsize
    out_bytes = jnp.dtype(out_dtype).itemsize

    # VMEM budget: double-buffered input/output tiles + f32 accumulator.
    tile_bytes = (
        2 * (tm_eff * dim + dim * 2 * th + th * dim) * cdt_bytes   # x, w13, w2 (x2 buf)
        + 2 * tm_eff * dim * out_bytes                             # output (x2 buf)
        + tm_eff * dim * 4                                         # accumulator
    )
    vmem_limit = int(min(max(2 * tile_bytes, 32 * 1024 * 1024), 56 * 1024 * 1024))

    cost = pl.CostEstimate(
        flops=int(6 * tokens_p * dim * hidden_p),
        transcendentals=int(tokens_p * hidden_p),
        bytes_accessed=int(
            tokens_p * dim * cdt_bytes
            + dim * 2 * hidden_p * cdt_bytes
            + hidden_p * dim * cdt_bytes
            + tokens_p * dim * out_bytes
        ),
    )

    grid = (tokens_p // tm_eff, n_chunks)
    out = pl.pallas_call(
        ffn_kernel,
        out_shape=jax.ShapeDtypeStruct((tokens_p, dim), out_dtype),
        grid_spec=pltpu.PrefetchScalarGridSpec(
            num_scalar_prefetch=0,
            grid=grid,
            in_specs=[
                pl.BlockSpec((tm_eff, dim), lambda i, k: (i, 0)),     # x tile
                pl.BlockSpec((dim, 2 * th), lambda i, k: (0, k)),     # fused W1/W3 chunk
                pl.BlockSpec((th, dim), lambda i, k: (k, 0)),         # W2 chunk
            ],
            out_specs=pl.BlockSpec((tm_eff, dim), lambda i, k: (i, 0)),
            scratch_shapes=[pltpu.VMEM((tm_eff, dim), jnp.float32)],
        ),
        compiler_params=pltpu.CompilerParams(
            dimension_semantics=("parallel", "arbitrary"),
            vmem_limit_bytes=vmem_limit,
        ),
        cost_estimate=cost,
    )(x2d, w13, w2_t)

    return out[:tokens].reshape(orig_shape)


# --------------------------------------------------------------------------
# Reference (same bf16 compute / f32 accumulate semantics)
# --------------------------------------------------------------------------
def reference_feed_forward(x, w1, w2, w3, compute_dtype=jnp.bfloat16):
    xb = x.astype(compute_dtype)
    h1 = jnp.dot(xb, w1.T.astype(compute_dtype), preferred_element_type=jnp.float32)
    h3 = jnp.dot(xb, w3.T.astype(compute_dtype), preferred_element_type=jnp.float32)
    g = jax.nn.silu(h1) * h3
    out = jnp.dot(g.astype(compute_dtype), w2.T.astype(compute_dtype),
                  preferred_element_type=jnp.float32)
    return out.astype(x.dtype)


if __name__ == "__main__":
    # Module config (small, TPU-tile friendly): dim=128, hidden_dim arg=256,
    # multiple_of=128  ->  effective hidden = 128*ceil(170/128) = 256.
    dim = 128
    hidden_dim_arg = 256
    multiple_of = 128
    hidden = _ffn_hidden_dim(hidden_dim_arg, multiple_of)  # 256

    batch, seq = 2, 8

    key = jax.random.PRNGKey(0)
    kx, k1, k2, k3 = jax.random.split(key, 4)
    x = jax.random.normal(kx, (batch, seq, dim), dtype=jnp.float32)
    # PyTorch nn.Linear weight layout: (out_features, in_features)
    w1 = jax.random.normal(k1, (hidden, dim), dtype=jnp.float32) * (1.0 / math.sqrt(dim))
    w3 = jax.random.normal(k3, (hidden, dim), dtype=jnp.float32) * (1.0 / math.sqrt(dim))
    w2 = jax.random.normal(k2, (dim, hidden), dtype=jnp.float32) * (1.0 / math.sqrt(hidden))

    # One-time weight prep (fuse + transpose + cast); outside the call path.
    w13, w2_t, th = pack_ffn_weights(w1, w2, w3, block_hidden=512)

    y = feed_forward(x, w13, w2_t, th, tm=256)
    y = jax.block_until_ready(y)

    y_ref = reference_feed_forward(x, w1, w2, w3)
    assert y.shape == x.shape
    max_err = jnp.max(jnp.abs(y - y_ref))
    assert jnp.allclose(y, y_ref, atol=2e-2, rtol=2e-2), f"max err {max_err}"

    print("KERNEL_OK")
</pallas_src>

<mosaic_0001>
module attributes {stable_mosaic.version = 11 : i64} {
  func.func @ffn_kernel(%arg0: i32, %arg1: i32, %arg2: memref<16x128xbf16, #tpu.memory_space<vmem>>, %arg3: memref<128x512xbf16, #tpu.memory_space<vmem>>, %arg4: memref<256x128xbf16, #tpu.memory_space<vmem>>, %arg5: memref<16x128xf32, #tpu.memory_space<vmem>>, %arg6: memref<16x128xf32, #tpu.memory_space<vmem>>) attributes {dimension_semantics = [#tpu.dimension_semantics<parallel>, #tpu.dimension_semantics<arbitrary>], iteration_bounds = array<i64: 1, 1>, scalar_prefetch = 0 : i64, scratch_operands = 1 : i64, tpu.core_type = #tpu.core_type<tc>, window_params = [{transform_indices = @transform_0, window_bounds = array<i64: 16, 128>}, {transform_indices = @transform_1, window_bounds = array<i64: 128, 512>}, {transform_indices = @transform_2, window_bounds = array<i64: 256, 128>}, {transform_indices = @transform_3, window_bounds = array<i64: 16, 128>}]} {
    %c0_i32 = arith.constant 0 : i32
    %0 = arith.cmpi eq, %arg1, %c0_i32 : i32
    %1 = arith.extui %0 : i1 to i32
    %c0_i32_0 = arith.constant 0 : i32
    %2 = arith.cmpi ne, %1, %c0_i32_0 : i32
    scf.if %2 {
      %cst_15 = arith.constant 0.000000e+00 : f32
      %25 = vector.broadcast %cst_15 : f32 to vector<16x128xf32>
      %c0_16 = arith.constant 0 : index
      %c0_17 = arith.constant 0 : index
      %26 = vector.load %arg6[%c0_16, %c0_17] : memref<16x128xf32, #tpu.memory_space<vmem>>, vector<16x128xf32>
      tpu.vector_store %arg6[%c0_16, %c0_17], %25 {strides = array<i32>} : memref<16x128xf32, #tpu.memory_space<vmem>>, vector<16x128xf32>,
    } else {
    }
    %c0 = arith.constant 0 : index
    %c0_1 = arith.constant 0 : index
    %3 = vector.load %arg2[%c0, %c0_1] : memref<16x128xbf16, #tpu.memory_space<vmem>>, vector<16x128xbf16>
    %c0_2 = arith.constant 0 : index
    %c0_3 = arith.constant 0 : index
    %4 = vector.load %arg3[%c0_2, %c0_3] : memref<128x512xbf16, #tpu.memory_space<vmem>>, vector<128x512xbf16>
    %cst = arith.constant dense<0.000000e+00> : vector<16x512xf32>
    %5 = tpu.matmul %3, %4, %cst {dimension_numbers = #tpu.dot_dimension_numbers<[1], [0], [0], [1], [0, 0, 1, 1], [], []>} : vector<16x128xbf16>, vector<128x512xbf16>, vector<16x512xf32> -> vector<16x512xf32>
    %6 = vector.extract_strided_slice %5 {offsets = [0, 0], sizes = [16, 256], strides = [1, 1]} : vector<16x512xf32> to vector<16x256xf32>
    %7 = vector.extract_strided_slice %5 {offsets = [0, 256], sizes = [16, 256], strides = [1, 1]} : vector<16x512xf32> to vector<16x256xf32>
    %cst_4 = arith.constant 0.000000e+00 : f32
    %8 = vector.broadcast %cst_4 : f32 to vector<16x256xf32>
    %9 = arith.subf %8, %6 : vector<16x256xf32>
    %10 = math.exp %9 : vector<16x256xf32>
    %cst_5 = arith.constant 1.000000e+00 : f32
    %11 = vector.broadcast %cst_5 : f32 to vector<16x256xf32>
    %12 = arith.addf %11, %10 : vector<16x256xf32>
    %13 = tpu.reciprocal %12 {approx = true} : vector<16x256xf32> -> vector<16x256xf32>
    %14 = arith.mulf %6, %13 : vector<16x256xf32>
    %15 = arith.mulf %14, %7 : vector<16x256xf32>
    %c0_6 = arith.constant 0 : index
    %c0_7 = arith.constant 0 : index
    %16 = vector.load %arg6[%c0_6, %c0_7] : memref<16x128xf32, #tpu.memory_space<vmem>>, vector<16x128xf32>
    %17 = arith.truncf %15 : vector<16x256xf32> to vector<16x256xbf16>
    %c0_8 = arith.constant 0 : index
    %c0_9 = arith.constant 0 : index
    %18 = vector.load %arg4[%c0_8, %c0_9] : memref<256x128xbf16, #tpu.memory_space<vmem>>, vector<256x128xbf16>
    %cst_10 = arith.constant dense<0.000000e+00> : vector<16x128xf32>
    %19 = tpu.matmul %17, %18, %cst_10 {dimension_numbers = #tpu.dot_dimension_numbers<[1], [0], [0], [1], [0, 0, 1, 1], [], []>} : vector<16x256xbf16>, vector<256x128xbf16>, vector<16x128xf32> -> vector<16x128xf32>
    %20 = arith.addf %16, %19 : vector<16x128xf32>
    %c0_11 = arith.constant 0 : index
    %c0_12 = arith.constant 0 : index
    %21 = vector.load %arg6[%c0_11, %c0_12] : memref<16x128xf32, #tpu.memory_space<vmem>>, vector<16x128xf32>
    tpu.vector_store %arg6[%c0_11, %c0_12], %20 {strides = array<i32>} : memref<16x128xf32, #tpu.memory_space<vmem>>, vector<16x128xf32>,
    %c0_i32_13 = arith.constant 0 : i32
    %22 = arith.cmpi eq, %arg1, %c0_i32_13 : i32
    %23 = arith.extui %22 : i1 to i32
    %c0_i32_14 = arith.constant 0 : i32
    %24 = arith.cmpi ne, %23, %c0_i32_14 : i32
    scf.if %24 {
      %c0_15 = arith.constant 0 : index
      %c0_16 = arith.constant 0 : index
      %25 = vector.load %arg6[%c0_15, %c0_16] : memref<16x128xf32, #tpu.memory_space<vmem>>, vector<16x128xf32>
      %c0_17 = arith.constant 0 : index
      %c0_18 = arith.constant 0 : index
      %26 = vector.load %arg5[%c0_17, %c0_18] : memref<16x128xf32, #tpu.memory_space<vmem>>, vector<16x128xf32>
      tpu.vector_store %arg5[%c0_17, %c0_18], %25 {strides = array<i32>} : memref<16x128xf32, #tpu.memory_space<vmem>>, vector<16x128xf32>,
    } else {
    }
    return
  }
  func.func @transform_0(%arg0: i32, %arg1: i32) -> (i32, i32) {
    %c0_i32 = arith.constant 0 : i32
    %c0_i32_0 = arith.constant 0 : i32
    return %arg0, %c0_i32 : i32, i32
  }
  func.func @transform_1(%arg0: i32, %arg1: i32) -> (i32, i32) {
    %c0_i32 = arith.constant 0 : i32
    %c0_i32_0 = arith.constant 0 : i32
    return %c0_i32, %arg1 : i32, i32
  }
  func.func @transform_2(%arg0: i32, %arg1: i32) -> (i32, i32) {
    %c0_i32 = arith.constant 0 : i32
    %c0_i32_0 = arith.constant 0 : i32
    return %arg1, %c0_i32 : i32, i32
  }
  func.func @transform_3(%arg0: i32, %arg1: i32) -> (i32, i32) {
    %c0_i32 = arith.constant 0 : i32
    %c0_i32_0 = arith.constant 0 : i32
    return %arg0, %c0_i32 : i32, i32
  }
}

</mosaic_0001>

<llo_original>
// kernel: tpu_custom_call.1
$region0: #{tpu_custom_call.1}
  #allocation0 [shape = 'u32[]', space=smem, size = 0x4, offset = 0x4, fixed_abs, tag = 'smem constant byte address 0x4 - core index']
  #allocation1 [shape = 'u32[72,128]{1,0:T(1,128)}', space=vmem, size = 0x9000, scoped, tag = 'internal scratch']
  #allocation2 [shape = 'f32[16,128]{1,0:T(8,128)}', space=vmem, size = 0x2000, scoped, tag = 'scratch operand']
  %s0 = inlined_call_operand.hbm [shape: bf16[16,128], index: 0, kind: input, shape index: {}]
  %s1 = inlined_call_operand.hbm [shape: bf16[128,512], index: 1, kind: input, shape index: {}]
  %s2 = inlined_call_operand.hbm [shape: bf16[256,128], index: 2, kind: input, shape index: {}]
  %s3 = inlined_call_operand.hbm [shape: f32[16,128], index: 3, kind: output, shape index: {}]
  %s4 = sld [smem:[#allocation0]]
  $region42: #{tpu_custom_call.1} parent=0
    _
  %s6 = ssub.s32 1, %s4
  %s7 = scalar_select 0, %s6, %s4
  $region1: #{tpu_custom_call.1} parent=0
    #allocation3 [shape = 'u8[4096]{0}', space=vmem, size = 0x1000, scoped, tag = 'input window, operand 0, single buffered']
    #allocation4 [shape = 's32[1]{0}', space=sflag, size = 0x4, scoped, tag = 'scoped memory for tpu_custom_call.1']
    #allocation5 [shape = 's32[1]{0}', space=sflag, size = 0x4, scoped, tag = 'scoped memory for tpu_custom_call.1']
    #allocation6 [shape = 'u8[131072]{0}', space=vmem, size = 0x20000, scoped, tag = 'input window, operand 1, single buffered']
    #allocation7 [shape = 's32[1]{0}', space=sflag, size = 0x4, scoped, tag = 'scoped memory for tpu_custom_call.1']
    #allocation8 [shape = 'u8[65536]{0}', space=vmem, size = 0x10000, scoped, tag = 'input window, operand 2, single buffered']
    #allocation9 [shape = 'u8[8192]{0}', space=vmem, size = 0x2000, scoped, tag = 'output window, operand 0, single buffered']
    %8 = vsyncpa [#allocation4], 0
    %9 = vsyncpa [#allocation7], 0
    %10 = vsyncpa [#allocation5], 0
    // Predicated region
    $region2: #{tpu_custom_call.1} parent=1 // pred_check
      _
    $region3: #{tpu_custom_call.1} parent=1 // pred_check_branch
      %12 = sbr.rel (0) target = $region5
    $region4: #{tpu_custom_call.1} parent=1 // pred_region
      %14 = vsyncadd [#allocation4], 0
      %s15 = sshll.u32 %s0, 4
      %s16 = int_to_ptr.hbm [resolvable:$true] %s15
      %s17 = sshll.u32 [#allocation3], 4
      %s18 = int_to_ptr.vmem [resolvable:$true] %s17
      %23 = dma.hbm_to_vmem [thread:$0]  %s16, 128, %s18, [#allocation4], 64, 64, 4
    $region5: #{tpu_custom_call.1} parent=1 // pred_fallthru
      _
    // Predicated region
    $region6: #{tpu_custom_call.1} parent=1 // pred_check
      _
    $region7: #{tpu_custom_call.1} parent=1 // pred_check_branch
      %25 = sbr.rel (0) target = $region9
    $region8: #{tpu_custom_call.1} parent=1 // pred_region
      %27 = vsyncadd [#allocation7], 0
      %s28 = sshll.u32 %s1, 4
      %s29 = int_to_ptr.hbm [resolvable:$true] %s28
      %s30 = sshll.u32 [#allocation6], 4
      %s31 = int_to_ptr.vmem [resolvable:$true] %s30
      %36 = dma.hbm_to_vmem [thread:$0]  %s29, 4096, %s31, [#allocation7], 256, 256, 16
    $region9: #{tpu_custom_call.1} parent=1 // pred_fallthru
      _
    // Predicated region
    $region10: #{tpu_custom_call.1} parent=1 // pred_check
      _
    $region11: #{tpu_custom_call.1} parent=1 // pred_check_branch
      %38 = sbr.rel (0) target = $region13
    $region12: #{tpu_custom_call.1} parent=1 // pred_region
      %40 = vsyncadd [#allocation7], 0
      %s41 = sshll.u32 %s2, 4
      %s42 = int_to_ptr.hbm [resolvable:$true] %s41
      %s43 = sshll.u32 [#allocation8], 4
      %s44 = int_to_ptr.vmem [resolvable:$true] %s43
      %49 = dma.hbm_to_vmem [thread:$0]  %s42, 2048, %s44, [#allocation7], 64, 64, 4
    $region13: #{tpu_custom_call.1} parent=1 // pred_fallthru
      _
    // Predicated region
    $region14: #{tpu_custom_call.1} parent=1 // pred_check
      _
    $region15: #{tpu_custom_call.1} parent=1 // pred_check_branch
      %51 = sbr.rel (0) target = $region17
    $region16: #{tpu_custom_call.1} parent=1 // pred_region
      %53 = dma.done [#allocation4], 128
    $region17: #{tpu_custom_call.1} parent=1 // pred_fallthru
      _
    // Predicated region
    $region18: #{tpu_custom_call.1} parent=1 // pred_check
      _
    $region19: #{tpu_custom_call.1} parent=1 // pred_check_branch
      %55 = sbr.rel (0) target = $region21
    $region20: #{tpu_custom_call.1} parent=1 // pred_region
      %57 = dma.done [#allocation7], 4096
    $region21: #{tpu_custom_call.1} parent=1 // pred_fallthru
      _
    // Predicated region
    $region22: #{tpu_custom_call.1} parent=1 // pred_check
      _
    $region23: #{tpu_custom_call.1} parent=1 // pred_check_branch
      %59 = sbr.rel (0) target = $region25
    $region24: #{tpu_custom_call.1} parent=1 // pred_region
      %61 = dma.done [#allocation7], 2048
    $region25: #{tpu_custom_call.1} parent=1 // pred_fallthru
      _
    %p62 = scmp.eq.s32.totalorder 0, 0
    // Predicated region
    $region26: #{tpu_custom_call.1} parent=1 // pred_check
      %p63 = pneg %p62
    $region27: #{tpu_custom_call.1} parent=1 // pred_check_branch
      %65 = sbr.rel (%p63) target = $region29
    $region28: #{tpu_custom_call.1} parent=1 // pred_region
      %66 = vst [vmem:[#allocation2] sm:$0xff] 0.0
      %67 = vst [vmem:[#allocation2 + $0x8] sm:$0xff] 0.0
    $region29: #{tpu_custom_call.1} parent=1 // pred_fallthru
      _
    %v68 = vld [vmem:[#allocation3] sm:$0xf]
    %v69 = vld [vmem:[#allocation3 + $0x4] sm:$0xf]
    %v70 = vld [vmem:[#allocation6] sm:$0xff]
    %v71 = vld [vmem:[#allocation6 + $0x8] sm:$0xff]
    %v72 = vld [vmem:[#allocation6 + $0x10] sm:$0xff]
    %v73 = vld [vmem:[#allocation6 + $0x18] sm:$0xff]
    %v74 = vld [vmem:[#allocation6 + $0x20] sm:$0xff]
    %v75 = vld [vmem:[#allocation6 + $0x28] sm:$0xff]
    %v76 = vld [vmem:[#allocation6 + $0x30] sm:$0xff]
    %v77 = vld [vmem:[#allocation6 + $0x38] sm:$0xff]
    %v78 = vld [vmem:[#allocation6 + $0x40] sm:$0xff]
    %v79 = vld [vmem:[#allocation6 + $0x48] sm:$0xff]
    %v80 = vld [vmem:[#allocation6 + $0x50] sm:$0xff]
    %v81 = vld [vmem:[#allocation6 + $0x58] sm:$0xff]
    %v82 = vld [vmem:[#allocation6 + $0x60] sm:$0xff]
    %v83 = vld [vmem:[#allocation6 + $0x68] sm:$0xff]
    %v84 = vld [vmem:[#allocation6 + $0x70] sm:$0xff]
    %v85 = vld [vmem:[#allocation6 + $0x78] sm:$0xff]
    %v86 = vld [vmem:[#allocation6 + $0x80] sm:$0xff]
    %v87 = vld [vmem:[#allocation6 + $0x88] sm:$0xff]
    %v88 = vld [vmem:[#allocation6 + $0x90] sm:$0xff]
    %v89 = vld [vmem:[#allocation6 + $0x98] sm:$0xff]
    %v90 = vld [vmem:[#allocation6 + $0xa0] sm:$0xff]
    %v91 = vld [vmem:[#allocation6 + $0xa8] sm:$0xff]
    %v92 = vld [vmem:[#allocation6 + $0xb0] sm:$0xff]
    %v93 = vld [vmem:[#allocation6 + $0xb8] sm:$0xff]
    %v94 = vld [vmem:[#allocation6 + $0xc0] sm:$0xff]
    %v95 = vld [vmem:[#allocation6 + $0xc8] sm:$0xff]
    %v96 = vld [vmem:[#allocation6 + $0xd0] sm:$0xff]
    %v97 = vld [vmem:[#allocation6 + $0xd8] sm:$0xff]
    %v98 = vld [vmem:[#allocation6 + $0xe0] sm:$0xff]
    %v99 = vld [vmem:[#allocation6 + $0xe8] sm:$0xff]
    %v100 = vld [vmem:[#allocation6 + $0xf0] sm:$0xff]
    %v101 = vld [vmem:[#allocation6 + $0xf8] sm:$0xff]
    %v104 = vunpack.c.l.b16 %v68
    %v105 = vunpack.c.l.b16 %v69
    %v106 = vpack.c.b16 %v105, %v104
    %v140 = vunpack.c.l.b16 %v70
    %v141 = vunpack.c.h.b16 %v70
    %v142 = vunpack.c.l.b16 %v71
    %v143 = vunpack.c.h.b16 %v71
    %v144 = vunpack.c.l.b16 %v72
    %v145 = vunpack.c.h.b16 %v72
    %v146 = vunpack.c.l.b16 %v73
    %v147 = vunpack.c.h.b16 %v73
    %v148 = vunpack.c.l.b16 %v74
    %v149 = vunpack.c.h.b16 %v74
    %v150 = vunpack.c.l.b16 %v75
    %v151 = vunpack.c.h.b16 %v75
    %v152 = vunpack.c.l.b16 %v76
    %v153 = vunpack.c.h.b16 %v76
    %v154 = vunpack.c.l.b16 %v77
    %v155 = vunpack.c.h.b16 %v77
    %v156 = vunpack.c.l.b16 %v78
    %v157 = vunpack.c.h.b16 %v78
    %v158 = vunpack.c.l.b16 %v79
    %v159 = vunpack.c.h.b16 %v79
    %v160 = vunpack.c.l.b16 %v80
    %v161 = vunpack.c.h.b16 %v80
    %v162 = vunpack.c.l.b16 %v81
    %v163 = vunpack.c.h.b16 %v81
    %v164 = vunpack.c.l.b16 %v82
    %v165 = vunpack.c.h.b16 %v82
    %v166 = vunpack.c.l.b16 %v83
    %v167 = vunpack.c.h.b16 %v83
    %v168 = vunpack.c.l.b16 %v84
    %v169 = vunpack.c.h.b16 %v84
    %v170 = vunpack.c.l.b16 %v85
    %v171 = vunpack.c.h.b16 %v85
    %v172 = vunpack.c.l.b16 %v86
    %v173 = vunpack.c.h.b16 %v86
    %v174 = vunpack.c.l.b16 %v87
    %v175 = vunpack.c.h.b16 %v87
    %v176 = vunpack.c.l.b16 %v88
    %v177 = vunpack.c.h.b16 %v88
    %v178 = vunpack.c.l.b16 %v89
    %v179 = vunpack.c.h.b16 %v89
    %v180 = vunpack.c.l.b16 %v90
    %v181 = vunpack.c.h.b16 %v90
    %v182 = vunpack.c.l.b16 %v91
    %v183 = vunpack.c.h.b16 %v91
    %v184 = vunpack.c.l.b16 %v92
    %v185 = vunpack.c.h.b16 %v92
    %v186 = vunpack.c.l.b16 %v93
    %v187 = vunpack.c.h.b16 %v93
    %v188 = vunpack.c.l.b16 %v94
    %v189 = vunpack.c.h.b16 %v94
    %v190 = vunpack.c.l.b16 %v95
    %v191 = vunpack.c.h.b16 %v95
    %v192 = vunpack.c.l.b16 %v96
    %v193 = vunpack.c.h.b16 %v96
    %v194 = vunpack.c.l.b16 %v97
    %v195 = vunpack.c.h.b16 %v97
    %v196 = vunpack.c.l.b16 %v98
    %v197 = vunpack.c.h.b16 %v98
    %v198 = vunpack.c.l.b16 %v99
    %v199 = vunpack.c.h.b16 %v99
    %v200 = vunpack.c.l.b16 %v100
    %v201 = vunpack.c.h.b16 %v100
    %v202 = vunpack.c.l.b16 %v101
    %v203 = vunpack.c.h.b16 %v101
    %v204 = vpack.c.b16 %v144, %v140
    %v205 = vpack.c.b16 %v145, %v141
    %v206 = vpack.c.b16 %v146, %v142
    %v207 = vpack.c.b16 %v147, %v143
    %v208 = vpack.c.b16 %v152, %v148
    %v209 = vpack.c.b16 %v153, %v149
    %v210 = vpack.c.b16 %v154, %v150
    %v211 = vpack.c.b16 %v155, %v151
    %v212 = vpack.c.b16 %v160, %v156
    %v213 = vpack.c.b16 %v161, %v157
    %v214 = vpack.c.b16 %v162, %v158
    %v215 = vpack.c.b16 %v163, %v159
    %v216 = vpack.c.b16 %v168, %v164
    %v217 = vpack.c.b16 %v169, %v165
    %v218 = vpack.c.b16 %v170, %v166
    %v219 = vpack.c.b16 %v171, %v167
    %v220 = vpack.c.b16 %v176, %v172
    %v221 = vpack.c.b16 %v177, %v173
    %v222 = vpack.c.b16 %v178, %v174
    %v223 = vpack.c.b16 %v179, %v175
    %v224 = vpack.c.b16 %v184, %v180
    %v225 = vpack.c.b16 %v185, %v181
    %v226 = vpack.c.b16 %v186, %v182
    %v227 = vpack.c.b16 %v187, %v183
    %v228 = vpack.c.b16 %v192, %v188
    %v229 = vpack.c.b16 %v193, %v189
    %v230 = vpack.c.b16 %v194, %v190
    %v231 = vpack.c.b16 %v195, %v191
    %v232 = vpack.c.b16 %v200, %v196
    %v233 = vpack.c.b16 %v201, %v197
    %v234 = vpack.c.b16 %v202, %v198
    %v235 = vpack.c.b16 %v203, %v199
    %268 = vmatpush.bf16.msra.mxu0 %v232
    %269 = vmatpush.bf16.msra.mxu0 %v228
    %270 = vmatpush.bf16.msra.mxu0 %v224
    %271 = vmatpush.bf16.msra.mxu0 %v220
    %272 = vmatpush.bf16.msra.mxu0 %v216
    %273 = vmatpush.bf16.msra.mxu0 %v212
    %274 = vmatpush.bf16.msra.mxu0 %v208
    %275 = vmatpush.bf16.msra.mxu0 %v204
    %276 = vmatmul.bf16.gmra.mxu0 %v106
    %v277 = vpop.f32.mrf.mxu0
    %v278 = vadd.f32 0.0, %v277
    %v279 = vpop.f32.mrf.mxu0
    %v280 = vadd.f32 0.0, %v279
    %281 = vdwg.mxu0
    %282 = vmatpush.bf16.msra.mxu0 %v233
    %283 = vmatpush.bf16.msra.mxu0 %v229
    %284 = vmatpush.bf16.msra.mxu0 %v225
    %285 = vmatpush.bf16.msra.mxu0 %v221
    %286 = vmatpush.bf16.msra.mxu0 %v217
    %287 = vmatpush.bf16.msra.mxu0 %v213
    %288 = vmatpush.bf16.msra.mxu0 %v209
    %289 = vmatpush.bf16.msra.mxu0 %v205
    %290 = vmatmul.bf16.gmra.mxu0 %v106
    %v291 = vpop.f32.mrf.mxu0
    %v292 = vadd.f32 0.0, %v291
    %v293 = vpop.f32.mrf.mxu0
    %v294 = vadd.f32 0.0, %v293
    %295 = vdwg.mxu0
    %296 = vmatpush.bf16.msra.mxu0 %v234
    %297 = vmatpush.bf16.msra.mxu0 %v230
    %298 = vmatpush.bf16.msra.mxu0 %v226
    %299 = vmatpush.bf16.msra.mxu0 %v222
    %300 = vmatpush.bf16.msra.mxu0 %v218
    %301 = vmatpush.bf16.msra.mxu0 %v214
    %302 = vmatpush.bf16.msra.mxu0 %v210
    %303 = vmatpush.bf16.msra.mxu0 %v206
    %304 = vmatmul.bf16.gmra.mxu0 %v106
    %v305 = vpop.f32.mrf.mxu0
    %v306 = vadd.f32 0.0, %v305
    %v307 = vpop.f32.mrf.mxu0
    %v308 = vadd.f32 0.0, %v307
    %309 = vdwg.mxu0
    %310 = vmatpush.bf16.msra.mxu0 %v235
    %311 = vmatpush.bf16.msra.mxu0 %v231
    %312 = vmatpush.bf16.msra.mxu0 %v227
    %313 = vmatpush.bf16.msra.mxu0 %v223
    %314 = vmatpush.bf16.msra.mxu0 %v219
    %315 = vmatpush.bf16.msra.mxu0 %v215
    %316 = vmatpush.bf16.msra.mxu0 %v211
    %317 = vmatpush.bf16.msra.mxu0 %v207
    %318 = vmatmul.bf16.gmra.mxu0 %v106
    %v319 = vpop.f32.mrf.mxu0
    %v320 = vadd.f32 0.0, %v319
    %v321 = vpop.f32.mrf.mxu0
    %v322 = vadd.f32 0.0, %v321
    %323 = vdwg.mxu0
    %v324 = vsub.f32 0.0, %v278
    %v325 = vsub.f32 0.0, %v292
    %v326 = vsub.f32 0.0, %v280
    %v327 = vsub.f32 0.0, %v294
    %v328 = vmul.f32 %v324, 1.442695
    %v329 = vpow.pop %v328
    %v330 = vmul.f32 %v325, 1.442695
    %v331 = vpow.pop %v330
    %v332 = vmul.f32 %v326, 1.442695
    %v333 = vpow.pop %v332
    %v334 = vmul.f32 %v327, 1.442695
    %v335 = vpow.pop %v334
    %v336 = vadd.f32 %v329, 1.0
    %v337 = vadd.f32 %v331, 1.0
    %v338 = vadd.f32 %v333, 1.0
    %v339 = vadd.f32 %v335, 1.0
    %v340 = vrcp.pop %v336
    %v341 = vrcp.pop %v337
    %v342 = vrcp.pop %v338
    %v343 = vrcp.pop %v339
    %v344 = vmul.f32 %v278, %v340
    %v345 = vmul.f32 %v292, %v341
    %v346 = vmul.f32 %v280, %v342
    %v347 = vmul.f32 %v294, %v343
    %v348 = vmul.f32 %v344, %v306
    %v349 = vmul.f32 %v345, %v320
    %v350 = vmul.f32 %v346, %v308
    %v351 = vmul.f32 %v347, %v322
    %v352 = vld [vmem:[#allocation2] sm:$0xff]
    %v353 = vld [vmem:[#allocation2 + $0x8] sm:$0xff]
    %v354 = vpack.c.bf16 %v350, %v348
    %v355 = vpack.c.bf16 %v351, %v349
    %v356 = vld [vmem:[#allocation8] sm:$0xf]
    %v357 = vld [vmem:[#allocation8 + $0x4] sm:$0xf]
    %v358 = vld [vmem:[#allocation8 + $0x8] sm:$0xf]
    %v359 = vld [vmem:[#allocation8 + $0xc] sm:$0xf]
    %v360 = vld [vmem:[#allocation8 + $0x10] sm:$0xf]
    %v361 = vld [vmem:[#allocation8 + $0x14] sm:$0xf]
    %v362 = vld [vmem:[#allocation8 + $0x18] sm:$0xf]
    %v363 = vld [vmem:[#allocation8 + $0x1c] sm:$0xf]
    %v364 = vld [vmem:[#allocation8 + $0x20] sm:$0xf]
    %v365 = vld [vmem:[#allocation8 + $0x24] sm:$0xf]
    %v366 = vld [vmem:[#allocation8 + $0x28] sm:$0xf]
    %v367 = vld [vmem:[#allocation8 + $0x2c] sm:$0xf]
    %v368 = vld [vmem:[#allocation8 + $0x30] sm:$0xf]
    %v369 = vld [vmem:[#allocation8 + $0x34] sm:$0xf]
    %v370 = vld [vmem:[#allocation8 + $0x38] sm:$0xf]
    %v371 = vld [vmem:[#allocation8 + $0x3c] sm:$0xf]
    %v372 = vld [vmem:[#allocation8 + $0x40] sm:$0xf]
    %v373 = vld [vmem:[#allocation8 + $0x44] sm:$0xf]
    %v374 = vld [vmem:[#allocation8 + $0x48] sm:$0xf]
    %v375 = vld [vmem:[#allocation8 + $0x4c] sm:$0xf]
    %v376 = vld [vmem:[#allocation8 + $0x50] sm:$0xf]
    %v377 = vld [vmem:[#allocation8 + $0x54] sm:$0xf]
    %v378 = vld [vmem:[#allocation8 + $0x58] sm:$0xf]
    %v379 = vld [vmem:[#allocation8 + $0x5c] sm:$0xf]
    %v380 = vld [vmem:[#allocation8 + $0x60] sm:$0xf]
    %v381 = vld [vmem:[#allocation8 + $0x64] sm:$0xf]
    %v382 = vld [vmem:[#allocation8 + $0x68] sm:$0xf]
    %v383 = vld [vmem:[#allocation8 + $0x6c] sm:$0xf]
    %v384 = vld [vmem:[#allocation8 + $0x70] sm:$0xf]
    %v385 = vld [vmem:[#allocation8 + $0x74] sm:$0xf]
    %v386 = vld [vmem:[#allocation8 + $0x78] sm:$0xf]
    %v387 = vld [vmem:[#allocation8 + $0x7c] sm:$0xf]
    %v420 = vunpack.c.l.b16 %v356
    %v421 = vunpack.c.l.b16 %v357
    %v422 = vunpack.c.l.b16 %v358
    %v423 = vunpack.c.l.b16 %v359
    %v424 = vunpack.c.l.b16 %v360
    %v425 = vunpack.c.l.b16 %v361
    %v426 = vunpack.c.l.b16 %v362
    %v427 = vunpack.c.l.b16 %v363
    %v428 = vunpack.c.l.b16 %v364
    %v429 = vunpack.c.l.b16 %v365
    %v430 = vunpack.c.l.b16 %v366
    %v431 = vunpack.c.l.b16 %v367
    %v432 = vunpack.c.l.b16 %v368
    %v433 = vunpack.c.l.b16 %v369
    %v434 = vunpack.c.l.b16 %v370
    %v435 = vunpack.c.l.b16 %v371
    %v436 = vunpack.c.l.b16 %v372
    %v437 = vunpack.c.l.b16 %v373
    %v438 = vunpack.c.l.b16 %v374
    %v439 = vunpack.c.l.b16 %v375
    %v440 = vunpack.c.l.b16 %v376
    %v441 = vunpack.c.l.b16 %v377
    %v442 = vunpack.c.l.b16 %v378
    %v443 = vunpack.c.l.b16 %v379
    %v444 = vunpack.c.l.b16 %v380
    %v445 = vunpack.c.l.b16 %v381
    %v446 = vunpack.c.l.b16 %v382
    %v447 = vunpack.c.l.b16 %v383
    %v448 = vunpack.c.l.b16 %v384
    %v449 = vunpack.c.l.b16 %v385
    %v450 = vunpack.c.l.b16 %v386
    %v451 = vunpack.c.l.b16 %v387
    %v452 = vpack.c.b16 %v421, %v420
    %v453 = vpack.c.b16 %v423, %v422
    %v454 = vpack.c.b16 %v425, %v424
    %v455 = vpack.c.b16 %v427, %v426
    %v456 = vpack.c.b16 %v429, %v428
    %v457 = vpack.c.b16 %v431, %v430
    %v458 = vpack.c.b16 %v433, %v432
    %v459 = vpack.c.b16 %v435, %v434
    %v460 = vpack.c.b16 %v437, %v436
    %v461 = vpack.c.b16 %v439, %v438
    %v462 = vpack.c.b16 %v441, %v440
    %v463 = vpack.c.b16 %v443, %v442
    %v464 = vpack.c.b16 %v445, %v444
    %v465 = vpack.c.b16 %v447, %v446
    %v466 = vpack.c.b16 %v449, %v448
    %v467 = vpack.c.b16 %v451, %v450
    %484 = vmatpush.bf16.msra.mxu0 %v459
    %485 = vmatpush.bf16.msra.mxu0 %v458
    %486 = vmatpush.bf16.msra.mxu0 %v457
    %487 = vmatpush.bf16.msra.mxu0 %v456
    %488 = vmatpush.bf16.msra.mxu0 %v455
    %489 = vmatpush.bf16.msra.mxu0 %v454
    %490 = vmatpush.bf16.msra.mxu0 %v453
    %491 = vmatpush.bf16.msra.mxu0 %v452
    %492 = vmatmul.bf16.gmra.mxu0 %v354
    %v493 = vpop.f32.mrf.mxu0
    %v494 = vadd.f32 0.0, %v493
    %v495 = vpop.f32.mrf.mxu0
    %v496 = vadd.f32 0.0, %v495
    %497 = vdwg.mxu0
    %498 = vmatpush.bf16.msra.mxu0 %v467
    %499 = vmatpush.bf16.msra.mxu0 %v466
    %500 = vmatpush.bf16.msra.mxu0 %v465
    %501 = vmatpush.bf16.msra.mxu0 %v464
    %502 = vmatpush.bf16.msra.mxu0 %v463
    %503 = vmatpush.bf16.msra.mxu0 %v462
    %504 = vmatpush.bf16.msra.mxu0 %v461
    %505 = vmatpush.bf16.msra.mxu0 %v460
    %506 = vmatmul.bf16.gmra.mxu0 %v355
    %v507 = vpop.f32.mrf.mxu0
    %v508 = vadd.f32 %v494, %v507
    %v509 = vpop.f32.mrf.mxu0
    %v510 = vadd.f32 %v496, %v509
    %511 = vdwg.mxu0
    %v512 = vadd.f32 %v352, %v508
    %v513 = vadd.f32 %v353, %v510
    %514 = vst [vmem:[#allocation2] sm:$0xff] %v512
    %515 = vst [vmem:[#allocation2 + $0x8] sm:$0xff] %v513
    // Predicated region
    $region30: #{tpu_custom_call.1} parent=1 // pred_check
      %p516 = pneg %p62
    $region31: #{tpu_custom_call.1} parent=1 // pred_check_branch
      %518 = sbr.rel (%p516) target = $region33
    $region32: #{tpu_custom_call.1} parent=1 // pred_region
      %v519 = vld [vmem:[#allocation2] sm:$0xff]
      %v520 = vld [vmem:[#allocation2 + $0x8] sm:$0xff]
      %521 = vst [vmem:[#allocation9] sm:$0xff] %v519
      %522 = vst [vmem:[#allocation9 + $0x8] sm:$0xff] %v520
    $region33: #{tpu_custom_call.1} parent=1 // pred_fallthru
      _
    // Predicated region
    $region34: #{tpu_custom_call.1} parent=1 // pred_check
      _
    $region35: #{tpu_custom_call.1} parent=1 // pred_check_branch
      %524 = sbr.rel (0) target = $region37
    $region36: #{tpu_custom_call.1} parent=1 // pred_region
      %526 = vsyncadd [#allocation5], 0
      %s527 = sshll.u32 [#allocation9], 4
      %s528 = int_to_ptr.vmem [resolvable:$true] %s527
      %s529 = sshll.u32 %s3, 4
      %s530 = int_to_ptr.hbm [resolvable:$true] %s529
      %535 = dma.vmem_to_hbm [thread:$0]  %s528, 256, %s530, [#allocation5], 128, 128, 8
    $region37: #{tpu_custom_call.1} parent=1 // pred_fallthru
      _
    // Predicated region
    $region38: #{tpu_custom_call.1} parent=1 // pred_check
      _
    $region39: #{tpu_custom_call.1} parent=1 // pred_check_branch
      %537 = sbr.rel (0) target = $region41
    $region40: #{tpu_custom_call.1} parent=1 // pred_region
      %539 = dma.done [#allocation5], 256
    $region41: #{tpu_custom_call.1} parent=1 // pred_fallthru
      _
    %540 = vsyncpa [#allocation4], 1
    %541 = vsyncpa [#allocation7], 1
    %542 = vsyncpa [#allocation5], 1

</llo_original>
